<compile_context>
chip_gen: v6e
topology: v6e:2x2x1
jax: 0.10.0
libtpu: 0.0.40
codegen_flags: <defaults>
</compile_context>

<pallas_src>
import functools
import math

import jax
import jax.numpy as jnp
from jax.experimental import pallas as pl
from jax.experimental.pallas import tpu as pltpu


# ----------------------------------------------------------------------------
# Per-generation configuration & tiling helpers
# ----------------------------------------------------------------------------
def _round_up(x, m):
    return (x + m - 1) // m * m


@functools.lru_cache(maxsize=None)
def _tpu_config():
    """Pick tile budgets from the chip's VMEM capacity (v7x=64MiB vs 128MiB)."""
    vmem = None
    try:
        info = pltpu.get_tpu_info()
        for attr in ('vmem_capacity_bytes', 'vmem_size_bytes', 'vmem_bytes'):
            v = getattr(info, attr, None)
            if v:
                vmem = int(v)
                break
    except Exception:
        vmem = None
    if vmem is None:
        try:
            kind = jax.devices()[0].device_kind.lower()
        except Exception:
            kind = ''
        if ('v4' in kind) or ('v5' in kind) or ('v6' in kind):
            vmem = 128 * 2**20
        else:                       # v7x (64 MiB) and unknown chips: be safe
            vmem = 64 * 2**20
    if vmem >= 100 * 2**20:         # v4 / v5e / v5p / v6e: big resident tiles
        return dict(max_tm=1024, whole_k=4608, vmem_limit=96 * 2**20)
    return dict(max_tm=512, whole_k=2048, vmem_limit=48 * 2**20)


def _k_n_tiles(Kd, Cout, whole_k):
    """K / N tile sizes and padded extents (lane / sublane aligned)."""
    padK = _round_up(Kd, 128)
    if padK <= whole_k:             # whole reduction in one tile (scratch-free)
        TK = padK
    else:                           # largest 128-multiple divisor <= whole_k
        TK = 128
        t = whole_k - (whole_k % 128)
        while t >= 256:
            if padK % t == 0:
                TK = t
                break
            t -= 128
    padN = _round_up(Cout, 128)
    if padN % 512 == 0:
        TN = 512
    elif padN % 256 == 0:
        TN = 256
    else:
        TN = 128
    return TK, padK, TN, padN


def _m_tile(M, max_tm):
    """Row tile: multiple of 16 (bf16 sublane packing), minimal zero padding."""
    if M <= max_tm:
        tm = max(16, _round_up(M, 16))
        return tm, tm
    cands = sorted({t for t in (max_tm, (3 * max_tm) // 4, max_tm // 2,
                                max_tm // 4, 128)
                    if t >= 128 and t % 128 == 0})
    best_tm, best_pad = None, None
    for tm in cands:
        padM = _round_up(M, tm)
        if best_pad is None or padM < best_pad or (padM == best_pad and tm > best_tm):
            best_tm, best_pad = tm, padM
    return best_tm, best_pad


# ----------------------------------------------------------------------------
# Pallas kernels
# ----------------------------------------------------------------------------
def _epilogue(acc, shift, relu):
    out = acc + shift
    if relu:
        out = jnp.maximum(out, 0.0)
    return out


def _mm_single_k_kernel(x_ref, w_ref, b_ref, o_ref, *, relu):
    # Whole K reduction in one block: no scratch, write epilogue directly.
    acc = jnp.dot(x_ref[...], w_ref[...], preferred_element_type=jnp.float32)
    o_ref[...] = _epilogue(acc, b_ref[...], relu).astype(o_ref.dtype)


def _mm_multi_k_kernel(x_ref, w_ref, b_ref, o_ref, acc_ref, *, relu):
    k = pl.program_id(2)

    @pl.when(k == 0)
    def _init():
        acc_ref[...] = jnp.zeros_like(acc_ref)

    acc_ref[...] += jnp.dot(x_ref[...], w_ref[...],
                            preferred_element_type=jnp.float32)

    @pl.when(k == pl.num_programs(2) - 1)
    def _fin():
        o_ref[...] = _epilogue(acc_ref[...], b_ref[...], relu).astype(o_ref.dtype)


def matmul_bn_act(cols, p, relu):
    """cols: (M, Kd) bf16 im2col rows.  Returns (M, Cout) bf16."""
    M, Kd = cols.shape
    padK, padN = p['w'].shape
    TK, TN = p['TK'], p['TN']
    Cout = p['Cout']
    cfg = _tpu_config()

    TM, padM = _m_tile(M, cfg['max_tm'])
    if (padM, padK) != (M, Kd):
        cols = jnp.pad(cols, ((0, padM - M), (0, padK - Kd)))

    nm, nn, nk = padM // TM, padN // TN, padK // TK
    # Keep >=2 parallel tiles so the second TensorCore on dual-core chips
    # (v7x) isn't idle on the low-resolution (1x1 / 2x2 spatial) convs.
    if nm * nn == 1 and TN >= 256:
        TN //= 2
        nn = padN // TN

    if nk == 1:
        kernel = functools.partial(_mm_single_k_kernel, relu=relu)
        grid = (nm, nn)
        in_specs = [pl.BlockSpec((TM, TK), lambda i, j: (i, 0)),
                    pl.BlockSpec((TK, TN), lambda i, j: (0, j)),
                    pl.BlockSpec((1, TN), lambda i, j: (0, j))]
        out_specs = pl.BlockSpec((TM, TN), lambda i, j: (i, j))
        scratch = []
        dims = ("parallel", "parallel")
    else:
        kernel = functools.partial(_mm_multi_k_kernel, relu=relu)
        grid = (nm, nn, nk)
        in_specs = [pl.BlockSpec((TM, TK), lambda i, j, k: (i, k)),
                    pl.BlockSpec((TK, TN), lambda i, j, k: (k, j)),
                    pl.BlockSpec((1, TN), lambda i, j, k: (0, j))]
        out_specs = pl.BlockSpec((TM, TN), lambda i, j, k: (i, j))
        scratch = [pltpu.VMEM((TM, TN), jnp.float32)]
        dims = ("parallel", "parallel", "arbitrary")

    out = pl.pallas_call(
        kernel,
        out_shape=jax.ShapeDtypeStruct((padM, padN), jnp.bfloat16),
        grid_spec=pltpu.PrefetchScalarGridSpec(
            num_scalar_prefetch=0,
            grid=grid,
            in_specs=in_specs,
            out_specs=out_specs,
            scratch_shapes=scratch,
        ),
        compiler_params=pltpu.CompilerParams(
            dimension_semantics=dims,
            vmem_limit_bytes=cfg['vmem_limit'],
        ),
    )(cols, p['w'], p['shift'])

    if (padM, padN) != (M, Cout):
        out = out[:M, :Cout]
    return out


def _sigmoid_kernel(x_ref, o_ref):
    o_ref[...] = jax.nn.sigmoid(x_ref[...].astype(jnp.float32))


def sigmoid_pallas(x):
    """Lane-dense element-wise sigmoid (bf16 in, f32 out) over any shape."""
    shape = x.shape
    flat = x.reshape(-1)
    T = flat.shape[0]
    L = 1024
    rows = -(-T // L)
    TR = min(512, _round_up(rows, 8))
    padded_rows = _round_up(rows, TR)
    pad = padded_rows * L - T
    if pad:
        flat = jnp.pad(flat, (0, pad))
    x2 = flat.reshape(padded_rows, L)
    y = pl.pallas_call(
        _sigmoid_kernel,
        out_shape=jax.ShapeDtypeStruct(x2.shape, jnp.float32),
        grid_spec=pltpu.PrefetchScalarGridSpec(
            num_scalar_prefetch=0,
            grid=(padded_rows // TR,),
            in_specs=[pl.BlockSpec((TR, L), lambda i: (i, 0))],
            out_specs=pl.BlockSpec((TR, L), lambda i: (i, 0)),
        ),
        compiler_params=pltpu.CompilerParams(
            dimension_semantics=("parallel",)),
    )(x2)
    return y.reshape(-1)[:T].reshape(shape)


# ----------------------------------------------------------------------------
# Conv wrapper (im2col glue in JAX, tiled matmul+BN+ReLU in Pallas)
# ----------------------------------------------------------------------------
def conv(x, p, *, stride=1, dilation=1, padding=1, relu=True):
    """x: NHWC array OR tuple of NHWC arrays (conceptually channel-concat)."""
    xs = x if isinstance(x, (tuple, list)) else (x,)
    N, H, W, _ = xs[0].shape
    K = p['K']
    Cout = p['Cout']
    Ho = (H + 2 * padding - dilation * (K - 1) - 1) // stride + 1
    Wo = (W + 2 * padding - dilation * (K - 1) - 1) // stride + 1

    xbs = [a.astype(jnp.bfloat16) for a in xs]
    if padding:
        xbs = [jnp.pad(a, ((0, 0), (padding, padding), (padding, padding), (0, 0)))
               for a in xbs]

    if K == 1 and len(xbs) == 1:
        xb = xbs[0]
        patch = jax.lax.slice(
            xb, (0, 0, 0, 0),
            (N, (Ho - 1) * stride + 1, (Wo - 1) * stride + 1, xb.shape[-1]),
            (1, stride, stride, 1))
        cols = patch.reshape(N * Ho * Wo, xb.shape[-1])
    else:
        # im2col; for multi-input (skip-connection) convs the per-tap channel
        # slices of each input are interleaved so the channel-concatenated
        # activation tensor is never materialised in HBM.
        pieces = []
        for kh in range(K):
            for kw in range(K):
                h0, w0 = kh * dilation, kw * dilation
                for xb in xbs:
                    pieces.append(jax.lax.slice(
                        xb, (0, h0, w0, 0),
                        (N, h0 + (Ho - 1) * stride + 1,
                         w0 + (Wo - 1) * stride + 1, xb.shape[-1]),
                        (1, stride, stride, 1)))
        cols = jnp.concatenate(pieces, axis=-1).reshape(N * Ho * Wo, p['Kd'])

    out = matmul_bn_act(cols, p, relu)
    return out.reshape(N, Ho, Wo, Cout)


def maxpool2(x):
    # MaxPool2d(2, 2, ceil_mode=True)
    N, H, W, C = x.shape
    Hp, Wp = -(-H // 2) * 2, -(-W // 2) * 2
    if (Hp, Wp) != (H, W):
        x = jnp.pad(x, ((0, 0), (0, Hp - H), (0, Wp - W), (0, 0)),
                    constant_values=-jnp.inf)
    return x.reshape(N, Hp // 2, 2, Wp // 2, 2, C).max(axis=(2, 4))


def upsample2x(x):
    """Exact 2x bilinear (align_corners=False): separable [0.25,0.75] filter
    with edge clamping -> pure streaming, no gather."""
    N, H, W, C = x.shape
    prev_h = jnp.concatenate([x[:, :1], x[:, :-1]], axis=1)
    next_h = jnp.concatenate([x[:, 1:], x[:, -1:]], axis=1)
    xh = jnp.stack([0.75 * x + 0.25 * prev_h,
                    0.75 * x + 0.25 * next_h], axis=2).reshape(N, 2 * H, W, C)
    prev_w = jnp.concatenate([xh[:, :, :1], xh[:, :, :-1]], axis=2)
    next_w = jnp.concatenate([xh[:, :, 1:], xh[:, :, -1:]], axis=2)
    return jnp.stack([0.75 * xh + 0.25 * prev_w,
                      0.75 * xh + 0.25 * next_w],
                     axis=3).reshape(N, 2 * H, 2 * W, C)


def upsample(x, factor):
    if factor == 2:
        return upsample2x(x)
    # Large-factor bilinear on the 1-channel output maps.  jax.image.resize's
    # 'bilinear' path is dense per-axis weight-matrix contractions (no gather).
    N, H, W, C = x.shape
    if C == 1:
        y = jax.image.resize(x[..., 0].astype(jnp.float32),
                             (N, H * factor, W * factor), method='bilinear')
        return y[..., None].astype(jnp.bfloat16)
    y = jax.image.resize(x.astype(jnp.float32),
                         (N, H * factor, W * factor, C), method='bilinear')
    return y.astype(jnp.bfloat16)


# ----------------------------------------------------------------------------
# Deterministic parameter construction
# ----------------------------------------------------------------------------
class KeyGen:
    def __init__(self, key):
        self._key = key

    def __call__(self):
        self._key, sub = jax.random.split(self._key)
        return sub


def init_conv_raw(key, K, cin, cout, bias=True):
    kw, kb = jax.random.split(key)
    w = jax.random.normal(kw, (K, K, cin, cout), jnp.float32) * math.sqrt(2.0 / (K * K * cin))
    b = (jax.random.normal(kb, (cout,), jnp.float32) * 0.01) if bias \
        else jnp.zeros((cout,), jnp.float32)
    return {'w': w.reshape(K * K * cin, cout), 'b': b, 'K': K}


def init_bn_raw(key, c, eps=1e-5):
    kg, kb = jax.random.split(key)
    return {'gamma': 1.0 + 0.1 * jax.random.normal(kg, (c,), jnp.float32),
            'beta': 0.05 * jax.random.normal(kb, (c,), jnp.float32),
            'mean': jnp.zeros((c,), jnp.float32),
            'var': jnp.ones((c,), jnp.float32),
            'eps': eps}


def fuse(convp, bnp=None):
    """Fold BN (scale into the bf16 weights, shift kept f32) and pad/tile."""
    Kd, cout = convp['w'].shape
    cfg = _tpu_config()
    TK, padK, TN, padN = _k_n_tiles(Kd, cout, cfg['whole_k'])
    w = convp['w']
    if bnp is None:
        shift = convp['b']
    else:
        s = bnp['gamma'] / jnp.sqrt(bnp['var'] + bnp['eps'])
        w = w * s[None, :]                       # fold BN scale into weights
        shift = bnp['beta'] - bnp['mean'] * s + convp['b'] * s
    w = w.astype(jnp.bfloat16)
    if (padK, padN) != (Kd, cout):
        w = jnp.pad(w, ((0, padK - Kd), (0, padN - cout)))
    shift = jnp.pad(shift.astype(jnp.float32), (0, padN - cout)).reshape(1, padN)
    return {'w': w, 'shift': shift, 'K': convp['K'],
            'Kd': Kd, 'Cout': cout, 'TK': TK, 'TN': TN}


def conv_bn(kg, K, cin, cout, bias=True):
    return fuse(init_conv_raw(kg(), K, cin, cout, bias), init_bn_raw(kg(), cout))


def conv_only(kg, K, cin, cout, bias=True):
    return fuse(init_conv_raw(kg(), K, cin, cout, bias), None)


# --- resnet18 BasicBlock / layers --------------------------------------------
def init_basic_block(kg, cin, cout, stride):
    p = {'conv1': conv_bn(kg, 3, cin, cout, bias=False),
         'conv2': conv_bn(kg, 3, cout, cout, bias=False),
         'stride': stride}
    if stride != 1 or cin != cout:
        p['down'] = conv_bn(kg, 1, cin, cout, bias=False)
    return p


def basic_block(x, p):
    out = conv(x, p['conv1'], stride=p['stride'], padding=1, relu=True)
    out = conv(out, p['conv2'], stride=1, padding=1, relu=False)
    idn = conv(x, p['down'], stride=p['stride'], padding=0, relu=False) if 'down' in p else x
    # residual add + ReLU run in bf16 outside the kernel (acceptable for inference)
    return jnp.maximum(out + idn, 0.0)


def init_layer(kg, cin, cout, stride, blocks=2):
    layer = [init_basic_block(kg, cin, cout, stride)]
    for _ in range(blocks - 1):
        layer.append(init_basic_block(kg, cout, cout, 1))
    return layer


def run_layer(x, layer):
    for blk in layer:
        x = basic_block(x, blk)
    return x


# --- sub-nets -----------------------------------------------------------------
def init_defocusnet(kg, n_channels, basic):
    return {'inconv': conv_bn(kg, 3, n_channels, basic),
            'layer1': init_layer(kg, basic, basic, 1),
            'layer2': init_layer(kg, basic, basic * 2, 2),
            'layer3': init_layer(kg, basic * 2, basic * 4, 2),
            'layer4': init_layer(kg, basic * 4, basic * 8, 2)}


def defocusnet_forward(D, x):
    x0 = conv(x, D['inconv'], relu=True)
    e1 = run_layer(x0, D['layer1'])
    e2 = run_layer(e1, D['layer2'])
    e3 = run_layer(e2, D['layer3'])
    e4 = run_layer(e3, D['layer4'])
    return x0, e1, e2, e3, e4


def init_refunet(kg, in_ch=1, inc_ch=64):
    R = {'conv0': conv_only(kg, 3, in_ch, inc_ch)}
    R['conv1'] = conv_bn(kg, 3, inc_ch, 64)
    for i in range(2, 6):
        R['conv%d' % i] = conv_bn(kg, 3, 64, 64)
    for i in range(4, 0, -1):
        R['conv_d%d' % i] = conv_bn(kg, 3, 128, 64)
    R['conv_d0'] = conv_only(kg, 3, 64, 1)
    return R


def refunet_forward(R, x):
    hx = conv(x, R['conv0'], relu=False)           # conv0 has no BN / no ReLU
    hx1 = conv(hx, R['conv1'], relu=True)
    hx = maxpool2(hx1)
    hx2 = conv(hx, R['conv2'], relu=True)
    hx = maxpool2(hx2)
    hx3 = conv(hx, R['conv3'], relu=True)
    hx = maxpool2(hx3)
    hx4 = conv(hx, R['conv4'], relu=True)
    hx = maxpool2(hx4)
    hx5 = conv(hx, R['conv5'], relu=True)
    hx = upsample(hx5, 2)
    d4 = conv((hx, hx4), R['conv_d4'], relu=True)
    hx = upsample(d4, 2)
    d3 = conv((hx, hx3), R['conv_d3'], relu=True)
    hx = upsample(d3, 2)
    d2 = conv((hx, hx2), R['conv_d2'], relu=True)
    hx = upsample(d2, 2)
    d1 = conv((hx, hx1), R['conv_d1'], relu=True)
    residual = conv(d1, R['conv_d0'], relu=False)
    return x + residual


def init_basnet(key, n_channels=3, basic=64):
    kg = KeyGen(key)
    P = {'inconv': conv_bn(kg, 3, n_channels, 64),
         'encoder1': init_layer(kg, 64, 64, 1),
         'encoder2': init_layer(kg, 64, 128, 2),
         'encoder3': init_layer(kg, 128, 256, 2),
         'encoder4': init_layer(kg, 256, 512, 2),
         'resb5': [init_basic_block(kg, basic * 8, basic * 8, 1) for _ in range(3)],
         'resb6': [init_basic_block(kg, basic * 8, basic * 8, 1) for _ in range(3)]}
    c8 = basic * 8
    for name, cin, cout in [
            ('convbg_1', c8, c8), ('convbg_m', c8, c8), ('convbg_2', c8, c8),
            ('conv6d_1', c8 * 2, c8), ('conv6d_m', c8, c8),
            ('conv5d_1', c8 * 2, c8), ('conv5d_m', c8, c8),
            ('conv4d_1', c8 * 2, c8), ('conv4d_m', c8, c8), ('conv4d_2', c8, basic * 4),
            ('conv3d_1', basic * 8, basic * 4), ('conv3d_m', basic * 4, basic * 4),
            ('conv3d_2', basic * 4, basic * 2),
            ('conv2d_1', basic * 4, basic * 2), ('conv2d_m', basic * 2, basic * 2),
            ('conv2d_2', basic * 2, basic),
            ('conv1d_1', basic * 2, basic), ('conv1d_m', basic, basic),
            ('conv1d_2', basic, basic)]:
        P[name] = conv_bn(kg, 3, cin, cout)
    # Replicate the original forward exactly: BOTH conv6d_2 and conv5d_2 are
    # followed by bn5d_2; bn6d_2 is created but never used.
    c6d2 = init_conv_raw(kg(), 3, c8, c8, True)
    _bn6d2_unused = init_bn_raw(kg(), c8)
    c5d2 = init_conv_raw(kg(), 3, c8, c8, True)
    bn5d2 = init_bn_raw(kg(), c8)
    P['conv6d_2'] = fuse(c6d2, bn5d2)
    P['conv5d_2'] = fuse(c5d2, bn5d2)
    for name, cin in [('outconvb', c8), ('outconv6', c8), ('outconv5', c8),
                      ('outconv4', basic * 4), ('outconv3', basic * 2),
                      ('outconv2', basic), ('outconv1', basic)]:
        P[name] = conv_only(kg, 3, cin, 1)
    P['refunet'] = init_refunet(kg, 1, 64)
    P['defocus'] = init_defocusnet(kg, 3, basic)
    return P


# ----------------------------------------------------------------------------
# BASNet forward
# ----------------------------------------------------------------------------
def basnet_forward(P, x_nchw, defocus_nchw):
    x = jnp.transpose(x_nchw, (0, 2, 3, 1))
    dfc = jnp.transpose(defocus_nchw, (0, 2, 3, 1))

    _, defocus1, defocus2, defocus3, defocus4 = defocusnet_forward(P['defocus'], dfc)

    hx = conv(x, P['inconv'], relu=True)
    h1 = run_layer(hx, P['encoder1'])
    h2 = run_layer(h1, P['encoder2'])
    h3 = run_layer(h2, P['encoder3'])
    h4 = run_layer(h3, P['encoder4'])

    hx = maxpool2(h4)
    for blk in P['resb5']:
        hx = basic_block(hx, blk)
    h5 = hx
    hx = maxpool2(h5)
    for blk in P['resb6']:
        hx = basic_block(hx, blk)
    h6 = hx

    hx = conv(h6, P['convbg_1'], dilation=2, padding=2, relu=True)
    hx = conv(hx, P['convbg_m'], dilation=2, padding=2, relu=True)
    hbg = conv(hx, P['convbg_2'], dilation=2, padding=2, relu=True)

    hx = conv((hbg, h6), P['conv6d_1'], relu=True)
    hx = conv(hx, P['conv6d_m'], dilation=2, padding=2, relu=True)
    hd6 = conv(hx, P['conv6d_2'], dilation=2, padding=2, relu=True)

    hx = upsample(hd6, 2)
    hx = conv((hx, h5), P['conv5d_1'], relu=True)
    hx = conv(hx, P['conv5d_m'], relu=True)
    hd5 = conv(hx, P['conv5d_2'], relu=True)

    hx = upsample(hd5, 2) + defocus4
    hx = conv((hx, h4), P['conv4d_1'], relu=True)
    hx = conv(hx, P['conv4d_m'], relu=True)
    hd4 = conv(hx, P['conv4d_2'], relu=True)

    hx = upsample(hd4, 2) + defocus3
    hx = conv((hx, h3), P['conv3d_1'], relu=True)
    hx = conv(hx, P['conv3d_m'], relu=True)
    hd3 = conv(hx, P['conv3d_2'], relu=True)

    hx = upsample(hd3, 2) + defocus2
    hx = conv((hx, h2), P['conv2d_1'], relu=True)
    hx = conv(hx, P['conv2d_m'], relu=True)
    hd2 = conv(hx, P['conv2d_2'], relu=True)

    hx = upsample(hd2, 2) + defocus1
    hx = conv((hx, h1), P['conv1d_1'], relu=True)
    hx = conv(hx, P['conv1d_m'], relu=True)
    hd1 = conv(hx, P['conv1d_2'], relu=True)

    db = upsample(conv(hbg, P['outconvb'], relu=False), 32)
    d6 = upsample(conv(hd6, P['outconv6'], relu=False), 32)
    d5 = upsample(conv(hd5, P['outconv5'], relu=False), 16)
    d4 = upsample(conv(hd4, P['outconv4'], relu=False), 8)
    d3 = upsample(conv(hd3, P['outconv3'], relu=False), 4)
    d2 = upsample(conv(hd2, P['outconv2'], relu=False), 2)
    d1 = conv(hd1, P['outconv1'], relu=False)

    dout = refunet_forward(P['refunet'], d1)

    # all 8 maps share the full-resolution (N,H,W,1) bf16 shape -> one fused
    # lane-dense sigmoid launch (f32 out)
    stacked = jnp.stack([dout, d1, d2, d3, d4, d5, d6, db], axis=0)
    sig = sigmoid_pallas(stacked)
    return tuple(jnp.transpose(sig[i], (0, 3, 1, 2)) for i in range(8))


# ----------------------------------------------------------------------------
if __name__ == "__main__":
    key = jax.random.PRNGKey(0)
    kp, kx, kd = jax.random.split(key, 3)

    params = init_basnet(kp, n_channels=3, basic=64)

    # small NCHW inputs (spatial must be divisible by 32 for the 5 downsampling stages)
    x = jax.random.normal(kx, (2, 3, 32, 32), jnp.float32)
    defocus = jax.random.normal(kd, (2, 3, 32, 32), jnp.float32)

    outs = basnet_forward(params, x, defocus)
    outs = jax.block_until_ready(outs)

    assert len(outs) == 8
    for o in outs:
        assert o.shape == (2, 1, 32, 32)
        assert bool(jnp.all(jnp.isfinite(o)))
    print("KERNEL_OK")
</pallas_src>

<mosaic_0001>
module attributes {stable_mosaic.version = 11 : i64} {
  func.func @_mm_single_k_kernel(%arg0: i32, %arg1: i32, %arg2: memref<512x128xbf16, #tpu.memory_space<vmem>>, %arg3: memref<128x128xbf16, #tpu.memory_space<vmem>>, %arg4: memref<1x128xf32, #tpu.memory_space<vmem>>, %arg5: memref<512x128xbf16, #tpu.memory_space<vmem>>) attributes {dimension_semantics = [#tpu.dimension_semantics<parallel>, #tpu.dimension_semantics<parallel>], iteration_bounds = array<i64: 4, 1>, scalar_prefetch = 0 : i64, scratch_operands = 0 : i64, tpu.core_type = #tpu.core_type<tc>, window_params = [{transform_indices = @transform_0, window_bounds = array<i64: 512, 128>}, {transform_indices = @transform_1, window_bounds = array<i64: 128, 128>}, {transform_indices = @transform_2, window_bounds = array<i64: 1, 128>}, {transform_indices = @transform_3, window_bounds = array<i64: 512, 128>}]} {
    %c0 = arith.constant 0 : index
    %c0_0 = arith.constant 0 : index
    %0 = vector.load %arg2[%c0, %c0_0] : memref<512x128xbf16, #tpu.memory_space<vmem>>, vector<512x128xbf16>
    %c0_1 = arith.constant 0 : index
    %c0_2 = arith.constant 0 : index
    %1 = vector.load %arg3[%c0_1, %c0_2] : memref<128x128xbf16, #tpu.memory_space<vmem>>, vector<128x128xbf16>
    %cst = arith.constant dense<0.000000e+00> : vector<512x128xf32>
    %2 = tpu.matmul %0, %1, %cst {dimension_numbers = #tpu.dot_dimension_numbers<[1], [0], [0], [1], [0, 0, 1, 1], [], []>} : vector<512x128xbf16>, vector<128x128xbf16>, vector<512x128xf32> -> vector<512x128xf32>
    %c0_3 = arith.constant 0 : index
    %c0_4 = arith.constant 0 : index
    %3 = vector.load %arg4[%c0_3, %c0_4] : memref<1x128xf32, #tpu.memory_space<vmem>>, vector<1x128xf32>
    %4 = vector.broadcast %3 : vector<1x128xf32> to vector<512x128xf32>
    %5 = arith.addf %2, %4 : vector<512x128xf32>
    %cst_5 = arith.constant 0.000000e+00 : f32
    %6 = vector.broadcast %cst_5 : f32 to vector<512x128xf32>
    %7 = arith.maximumf %5, %6 : vector<512x128xf32>
    %8 = arith.truncf %7 : vector<512x128xf32> to vector<512x128xbf16>
    %c0_6 = arith.constant 0 : index
    %c0_7 = arith.constant 0 : index
    %9 = vector.load %arg5[%c0_6, %c0_7] : memref<512x128xbf16, #tpu.memory_space<vmem>>, vector<512x128xbf16>
    tpu.vector_store %arg5[%c0_6, %c0_7], %8 {strides = array<i32>} : memref<512x128xbf16, #tpu.memory_space<vmem>>, vector<512x128xbf16>,
    return
  }
  func.func @transform_0(%arg0: i32, %arg1: i32) -> (i32, i32) {
    %c0_i32 = arith.constant 0 : i32
    %c0_i32_0 = arith.constant 0 : i32
    return %arg0, %c0_i32 : i32, i32
  }
  func.func @transform_1(%arg0: i32, %arg1: i32) -> (i32, i32) {
    %c0_i32 = arith.constant 0 : i32
    %c0_i32_0 = arith.constant 0 : i32
    return %c0_i32, %arg1 : i32, i32
  }
  func.func @transform_2(%arg0: i32, %arg1: i32) -> (i32, i32) {
    %c0_i32 = arith.constant 0 : i32
    %c0_i32_0 = arith.constant 0 : i32
    return %c0_i32, %arg1 : i32, i32
  }
  func.func @transform_3(%arg0: i32, %arg1: i32) -> (i32, i32) {
    %c0_i32 = arith.constant 0 : i32
    return %arg0, %arg1 : i32, i32
  }
}

</mosaic_0001>

<llo_original>
// kernel: tpu_custom_call.1
$region0: #{tpu_custom_call.1}
  #allocation0 [shape = 'u32[]', space=smem, size = 0x4, offset = 0x4, fixed_abs, tag = 'smem constant byte address 0x4 - core index']
  #allocation1 [shape = 'u32[144,128]{1,0:T(1,128)}', space=vmem, size = 0x12000, scoped, tag = 'internal scratch']
  %s0 = inlined_call_operand.hbm [shape: bf16[2048,128], index: 0, kind: input, shape index: {}]
  %s1 = inlined_call_operand.hbm [shape: bf16[128,128], index: 1, kind: input, shape index: {}]
  %s2 = inlined_call_operand.vmem [shape: f32[1,128], index: 2, kind: input, shape index: {}]
  %s3 = inlined_call_operand.hbm [shape: bf16[2048,128], index: 3, kind: output, shape index: {}]
  %s4 = sld [smem:[#allocation0]]
  $region53: #{tpu_custom_call.1} parent=0
    _
  %s6 = ssub.s32 1, %s4
  %s7 = scalar_select 0, %s6, %s4
  $region1: #{tpu_custom_call.1} parent=0
    #allocation2 [shape = 'u8[262144]{0}', space=vmem, size = 0x40000, scoped, tag = 'input window, operand 0']
    #allocation3 [shape = 's32[2]{0}', space=sflag, size = 0x8, scoped, tag = 'scoped memory for tpu_custom_call.1']
    #allocation4 [shape = 's32[2]{0}', space=sflag, size = 0x8, scoped, tag = 'scoped memory for tpu_custom_call.1']
    #allocation5 [shape = 'u8[32768]{0}', space=vmem, size = 0x8000, scoped, tag = 'input window, operand 1, single buffered']
    #allocation6 [shape = 's32[1]{0}', space=sflag, size = 0x4, scoped, tag = 'scoped memory for tpu_custom_call.1']
    #allocation7 [shape = 'u8[262144]{0}', space=vmem, size = 0x40000, scoped, tag = 'output window, operand 0']
    %8 = vsyncpa [#allocation3], 0
    %s9 = scalar_lea.sflag [#allocation3], 1
    %10 = vsyncpa %s9, 0
    %11 = vsyncpa [#allocation6], 0
    %12 = vsyncpa [#allocation4], 0
    %s13 = scalar_lea.sflag [#allocation4], 1
    %14 = vsyncpa %s13, 0
    loop: start=0, step=1, limit=6
    $region2: #{tpu_custom_call.1} parent=1 // loop_pre_header
      _
    $region3: #{tpu_custom_call.1} parent=1 // loop_header
      %s16 = sphi 0, %s20
      %p17 = scmp.ge.s32.totalorder %s16, 6
      %s23 = sphi 0, %s35
      %s24 = sphi 0, %s31
      %s25 = sphi 0, %s23
      %s26 = sphi 0, %s24
      %s27 = sphi 0, %s25
      %s28 = sphi 0, %s26
      %s38 = sphi 0, %s40
      %s41 = sphi 0, %s38
      %s42 = sphi 0, %s41
      %s58 = sphi 0, %s42
      %s64 = sphi 0, %s66
      %s67 = sphi 0, %s64
      %s68 = sphi 0, %s67
      %s84 = sphi 0, %s68
      %s90 = sphi 0, %s92
      %s93 = sphi 0, %s90
      %s94 = sphi 0, %s93
      %s110 = sphi 0, %s94
      %s118 = sphi 0, %s120
      %s121 = sphi 0, %s118
      %s122 = sphi 0, %s121
      %s138 = sphi 0, %s122
    $region4: #{tpu_custom_call.1} parent=1 // loop_header_branch
      %19 = sbr.rel (%p17) target = $region8
    $region5: #{tpu_custom_call.1} parent=1 // loop_body
      %s21 = ssub.s32 %s16, 1
      %s22 = ssub.s32 %s16, 2
      %s29 = sadd.s32 1, %s24
      %p30 = scmp.ge.s32.totalorder %s29, 1
      %s31 = scalar_select %p30, 0, %s29
      %s32 = sadd.s32 1, %s23
      %s33 = scalar_select %p30, %s32, %s23
      %p34 = scmp.ge.s32.totalorder %s33, 4
      %s35 = scalar_select %p34, 0, %s33
      %s36 = ssub.s32 %s23, %s35
      %p37 = scmp.eq.s32.totalorder %s36, 0
      %s39 = sadd.s32 %s38, 1
      %s40 = scalar_select %p37, %s38, %s39
      %p43 = pneg %p37
      %p44 = scmp.eq.s32.totalorder %s16, 3
      %p45 = por %p43, %p44
      %p46 = scmp.ne.s32.totalorder %s38, %s41
      %p47 = scmp.eq.s32.totalorder %s16, 0
      %p48 = por %p46, %p47
      %p49 = scmp.ne.s32.totalorder %s38, %s41
      %p50 = scmp.eq.s32.totalorder %s21, 3
      %p51 = por %p49, %p50
      %p52 = scmp.ne.s32.totalorder %s41, %s42
      %p53 = scmp.eq.s32.totalorder %s21, 0
      %p54 = por %p52, %p53
      %p55 = scmp.ne.s32.totalorder %s41, %s42
      %p56 = scmp.eq.s32.totalorder %s22, 3
      %p57 = por %p55, %p56
      %p59 = scmp.ne.s32.totalorder %s42, %s58
      %p60 = scmp.eq.s32.totalorder %s22, 0
      %p61 = por %p59, %p60
      %s62 = ssub.s32 %s24, %s31
      %p63 = scmp.eq.s32.totalorder %s62, 0
      %s65 = sadd.s32 %s64, 1
      %s66 = scalar_select %p63, %s64, %s65
      %p69 = pneg %p63
      %p70 = scmp.eq.s32.totalorder %s16, 3
      %p71 = por %p69, %p70
      %p72 = scmp.ne.s32.totalorder %s64, %s67
      %p73 = scmp.eq.s32.totalorder %s16, 0
      %p74 = por %p72, %p73
      %p75 = scmp.ne.s32.totalorder %s64, %s67
      %p76 = scmp.eq.s32.totalorder %s21, 3
      %p77 = por %p75, %p76
      %p78 = scmp.ne.s32.totalorder %s67, %s68
      %p79 = scmp.eq.s32.totalorder %s21, 0
      %p80 = por %p78, %p79
      %p81 = scmp.ne.s32.totalorder %s67, %s68
      %p82 = scmp.eq.s32.totalorder %s22, 3
      %p83 = por %p81, %p82
      %p85 = scmp.ne.s32.totalorder %s68, %s84
      %p86 = scmp.eq.s32.totalorder %s22, 0
      %p87 = por %p85, %p86
      %s88 = ssub.s32 %s24, %s31
      %p89 = scmp.eq.s32.totalorder %s88, 0
      %s91 = sadd.s32 %s90, 1
      %s92 = scalar_select %p89, %s90, %s91
      %p95 = pneg %p89
      %p96 = scmp.eq.s32.totalorder %s16, 3
      %p97 = por %p95, %p96
      %p98 = scmp.ne.s32.totalorder %s90, %s93
      %p99 = scmp.eq.s32.totalorder %s16, 0
      %p100 = por %p98, %p99
      %p101 = scmp.ne.s32.totalorder %s90, %s93
      %p102 = scmp.eq.s32.totalorder %s21, 3
      %p103 = por %p101, %p102
      %p104 = scmp.ne.s32.totalorder %s93, %s94
      %p105 = scmp.eq.s32.totalorder %s21, 0
      %p106 = por %p104, %p105
      %p107 = scmp.ne.s32.totalorder %s93, %s94
      %p108 = scmp.eq.s32.totalorder %s22, 3
      %p109 = por %p107, %p108
      %p111 = scmp.ne.s32.totalorder %s94, %s110
      %p112 = scmp.eq.s32.totalorder %s22, 0
      %p113 = por %p111, %p112
      %s114 = ssub.s32 %s23, %s35
      %s115 = ssub.s32 %s24, %s31
      %s116 = sor.u32 %s114, %s115
      %p117 = scmp.eq.s32.totalorder %s116, 0
      %s119 = sadd.s32 %s118, 1
      %s120 = scalar_select %p117, %s118, %s119
      %p123 = pneg %p117
      %p124 = scmp.eq.s32.totalorder %s16, 3
      %p125 = por %p123, %p124
      %p126 = scmp.ne.s32.totalorder %s118, %s121
      %p127 = scmp.eq.s32.totalorder %s16, 0
      %p128 = por %p126, %p127
      %p129 = scmp.ne.s32.totalorder %s118, %s121
      %p130 = scmp.eq.s32.totalorder %s21, 3
      %p131 = por %p129, %p130
      %p132 = scmp.ne.s32.totalorder %s121, %s122
      %p133 = scmp.eq.s32.totalorder %s21, 0
      %p134 = por %p132, %p133
      %p135 = scmp.ne.s32.totalorder %s121, %s122
      %p136 = scmp.eq.s32.totalorder %s22, 3
      %p137 = por %p135, %p136
      %p139 = scmp.ne.s32.totalorder %s122, %s138
      %p140 = scmp.eq.s32.totalorder %s22, 0
      %p141 = por %p139, %p140
      %p142 = scmp.le.s32.totalorder 1, %s16
      %p143 = scmp.lt.s32.totalorder %s16, 5
      %p144 = pnand %p142, %p143
      %p145 = pneg %p144
      // Predicated region
      $region9: #{tpu_custom_call.1} parent=5 // pred_check
        _
      $region10: #{tpu_custom_call.1} parent=5 // pred_check_branch
        %147 = sbr.rel (%p144) target = $region12
      $region11: #{tpu_custom_call.1} parent=5 // pred_region
        %s148 = ssub.s32 %s16, 1
        // Predicated region
        $region13: #{tpu_custom_call.1} parent=11 // pred_check
          %p149 = pneg %p80
        $region14: #{tpu_custom_call.1} parent=11 // pred_check_branch
          %151 = sbr.rel (%p149) target = $region16
        $region15: #{tpu_custom_call.1} parent=11 // pred_region
          %s153 = ssub.s32 1024, 1024
          %154 = vsyncadd [#allocation6], %s153
          %s155 = smul.addr %s26, 64
          %s156 = scalar_lea.hbm %s1, %s155
          %s157 = sshll.u32 [#allocation5], 4
          %s158 = int_to_ptr.vmem [resolvable:$true] %s157
          %163 = dma.hbm_to_vmem [thread:$0]  %s156, 1024, %s158, [#allocation6], 64, 64, 4
        $region16: #{tpu_custom_call.1} parent=11 // pred_fallthru
          _
        // Predicated region
        $region17: #{tpu_custom_call.1} parent=11 // pred_check
          %p164 = pneg %p106
        $region18: #{tpu_custom_call.1} parent=11 // pred_check_branch
          %166 = sbr.rel (%p164) target = $region20
        $region19: #{tpu_custom_call.1} parent=11 // pred_region
          %p167 = scmp.lt.s32.totalorder %s26, 0
          %s168 = scalar_select %p167, %s26, 0
          %s169 = scalar_lea.vmem %s2, %s168
        $region20: #{tpu_custom_call.1} parent=11 // pred_fallthru
          _
      $region12: #{tpu_custom_call.1} parent=5 // pred_fallthru
        _
      %p170 = scmp.lt.s32.totalorder %s16, 4
      // Predicated region
      $region21: #{tpu_custom_call.1} parent=5 // pred_check
        %p171 = pneg %p170
      $region22: #{tpu_custom_call.1} parent=5 // pred_check_branch
        %173 = sbr.rel (%p171) target = $region24
      $region23: #{tpu_custom_call.1} parent=5 // pred_region
        // Predicated region
        $region25: #{tpu_custom_call.1} parent=23 // pred_check
          %p174 = pneg %p48
        $region26: #{tpu_custom_call.1} parent=23 // pred_check_branch
          %176 = sbr.rel (%p174) target = $region28
        $region27: #{tpu_custom_call.1} parent=23 // pred_region
          %s177 = sand.u32 %s38, 1
          %s178 = scalar_lea.sflag [#allocation3], %s177
          %s179 = sand.u32 %s38, 1
          %s180 = smul.addr %s179, 256
          %s181 = scalar_lea.vmem [#allocation2], %s180
          %s182 = smul.u32 64, %s23
          %s184 = ssub.s32 4096, 4096
          %185 = vsyncadd %s178, %s184
          %s186 = smul.addr %s182, 64
          %s187 = scalar_lea.hbm %s0, %s186
          %s188 = sshll.u32 %s181, 4
          %s189 = int_to_ptr.vmem [resolvable:$true] %s188
          %194 = dma.hbm_to_vmem [thread:$0]  %s187, 4096, %s189, %s178, 64, 64, 4
        $region28: #{tpu_custom_call.1} parent=23 // pred_fallthru
          _
      $region24: #{tpu_custom_call.1} parent=5 // pred_fallthru
        _
      %p195 = scmp.le.s32.totalorder 1, %s16
      %p196 = scmp.lt.s32.totalorder %s16, 5
      %p197 = pnand %p195, %p196
      %p198 = pneg %p197
      // Predicated region
      $region29: #{tpu_custom_call.1} parent=5 // pred_check
        _
      $region30: #{tpu_custom_call.1} parent=5 // pred_check_branch
        %200 = sbr.rel (%p197) target = $region32
      $region31: #{tpu_custom_call.1} parent=5 // pred_region
        %s201 = ssub.s32 %s16, 1
        %s202 = sand.u32 %s41, 1
        %s203 = scalar_lea.sflag [#allocation3], %s202
        %s204 = sand.u32 %s41, 1
        %s205 = smul.addr %s204, 256
        %s206 = scalar_lea.vmem [#allocation2], %s205
        // Predicated region
        $region33: #{tpu_custom_call.1} parent=31 // pred_check
          %p207 = pneg %p54
        $region34: #{tpu_custom_call.1} parent=31 // pred_check_branch
          %209 = sbr.rel (%p207) target = $region36
        $region35: #{tpu_custom_call.1} parent=31 // pred_region
          %210 = dma.done %s203, 4096
        $region36: #{tpu_custom_call.1} parent=31 // pred_fallthru
          _
        // Predicated region
        $region37: #{tpu_custom_call.1} parent=31 // pred_check
          %p211 = pneg %p80
        $region38: #{tpu_custom_call.1} parent=31 // pred_check_branch
          %213 = sbr.rel (%p211) target = $region40
        $region39: #{tpu_custom_call.1} parent=31 // pred_region
          %214 = dma.done [#allocation6], 1024
        $region40: #{tpu_custom_call.1} parent=31 // pred_fallthru
          _
        %s215 = sand.u32 %s41, 1
        %s216 = scalar_lea.sflag [#allocation3], %s215
        %s217 = sand.u32 %s41, 1
        %s218 = smul.addr %s217, 256
        %s219 = scalar_lea.vmem [#allocation2], %s218
        %p220 = pneg %p54
        %p221 = pneg %p51
        %p222 = pneg %p80
        %p223 = pneg %p77
        %p224 = scmp.lt.s32.totalorder %s26, 0
        %s225 = scalar_select %p224, %s26, 0
        %s226 = scalar_lea.vmem %s2, %s225
        %p227 = pneg %p106
        %p228 = pneg %p103
        %p229 = pneg %p134
        %p230 = pneg %p131
        %s231 = sand.u32 %s121, 1
        %s232 = scalar_lea.sflag [#allocation4], %s231
        %s233 = sand.u32 %s121, 1
        %s234 = smul.addr %s233, 256
        %s235 = scalar_lea.vmem [#allocation7], %s234
        %s236 = smul.u32 64, %s25
        %p237 = scmp.lt.s32.totalorder %s26, 0
        %s238 = scalar_select %p237, %s26, 0
        %s239 = scalar_lea.vmem %s2, %s238
        %s240 = smul.u32 64, %s25
        %v242 = vld [vmem:[%s206] sm:$0xf]
        %v243 = vld [vmem:[%s206 + $0x4] sm:$0xf]
        %v244 = vld [vmem:[%s206 + $0x8] sm:$0xf]
        %v245 = vld [vmem:[%s206 + $0xc] sm:$0xf]
        %v246 = vld [vmem:[%s206 + $0x10] sm:$0xf]
        %v247 = vld [vmem:[%s206 + $0x14] sm:$0xf]
        %v248 = vld [vmem:[%s206 + $0x18] sm:$0xf]
        %v249 = vld [vmem:[%s206 + $0x1c] sm:$0xf]
        %v250 = vld [vmem:[%s206 + $0x20] sm:$0xf]
        %v251 = vld [vmem:[%s206 + $0x24] sm:$0xf]
        %v252 = vld [vmem:[%s206 + $0x28] sm:$0xf]
        %v253 = vld [vmem:[%s206 + $0x2c] sm:$0xf]
        %v254 = vld [vmem:[%s206 + $0x30] sm:$0xf]
        %v255 = vld [vmem:[%s206 + $0x34] sm:$0xf]
        %v256 = vld [vmem:[%s206 + $0x38] sm:$0xf]
        %v257 = vld [vmem:[%s206 + $0x3c] sm:$0xf]
        %v258 = vld [vmem:[%s206 + $0x40] sm:$0xf]
        %v259 = vld [vmem:[%s206 + $0x44] sm:$0xf]
        %v260 = vld [vmem:[%s206 + $0x48] sm:$0xf]
        %v261 = vld [vmem:[%s206 + $0x4c] sm:$0xf]
        %v262 = vld [vmem:[%s206 + $0x50] sm:$0xf]
        %v263 = vld [vmem:[%s206 + $0x54] sm:$0xf]
        %v264 = vld [vmem:[%s206 + $0x58] sm:$0xf]
        %v265 = vld [vmem:[%s206 + $0x5c] sm:$0xf]
        %v266 = vld [vmem:[%s206 + $0x60] sm:$0xf]
        %v267 = vld [vmem:[%s206 + $0x64] sm:$0xf]
        %v268 = vld [vmem:[%s206 + $0x68] sm:$0xf]
        %v269 = vld [vmem:[%s206 + $0x6c] sm:$0xf]
        %v270 = vld [vmem:[%s206 + $0x70] sm:$0xf]
        %v271 = vld [vmem:[%s206 + $0x74] sm:$0xf]
        %v272 = vld [vmem:[%s206 + $0x78] sm:$0xf]
        %v273 = vld [vmem:[%s206 + $0x7c] sm:$0xf]
        %v274 = vld [vmem:[%s206 + $0x80] sm:$0xf]
        %v275 = vld [vmem:[%s206 + $0x84] sm:$0xf]
        %v276 = vld [vmem:[%s206 + $0x88] sm:$0xf]
        %v277 = vld [vmem:[%s206 + $0x8c] sm:$0xf]
        %v278 = vld [vmem:[%s206 + $0x90] sm:$0xf]
        %v279 = vld [vmem:[%s206 + $0x94] sm:$0xf]
        %v280 = vld [vmem:[%s206 + $0x98] sm:$0xf]
        %v281 = vld [vmem:[%s206 + $0x9c] sm:$0xf]
        %v282 = vld [vmem:[%s206 + $0xa0] sm:$0xf]
        %v283 = vld [vmem:[%s206 + $0xa4] sm:$0xf]
        %v284 = vld [vmem:[%s206 + $0xa8] sm:$0xf]
        %v285 = vld [vmem:[%s206 + $0xac] sm:$0xf]
        %v286 = vld [vmem:[%s206 + $0xb0] sm:$0xf]
        %v287 = vld [vmem:[%s206 + $0xb4] sm:$0xf]
        %v288 = vld [vmem:[%s206 + $0xb8] sm:$0xf]
        %v289 = vld [vmem:[%s206 + $0xbc] sm:$0xf]
        %v290 = vld [vmem:[%s206 + $0xc0] sm:$0xf]
        %v291 = vld [vmem:[%s206 + $0xc4] sm:$0xf]
        %v292 = vld [vmem:[%s206 + $0xc8] sm:$0xf]
        %v293 = vld [vmem:[%s206 + $0xcc] sm:$0xf]
        %v294 = vld [vmem:[%s206 + $0xd0] sm:$0xf]
        %v295 = vld [vmem:[%s206 + $0xd4] sm:$0xf]
        %v296 = vld [vmem:[%s206 + $0xd8] sm:$0xf]
        %v297 = vld [vmem:[%s206 + $0xdc] sm:$0xf]
        %v298 = vld [vmem:[%s206 + $0xe0] sm:$0xf]
        %v299 = vld [vmem:[%s206 + $0xe4] sm:$0xf]
        %v300 = vld [vmem:[%s206 + $0xe8] sm:$0xf]
        %v301 = vld [vmem:[%s206 + $0xec] sm:$0xf]
        %v302 = vld [vmem:[%s206 + $0xf0] sm:$0xf]
        %v303 = vld [vmem:[%s206 + $0xf4] sm:$0xf]
        %v304 = vld [vmem:[%s206 + $0xf8] sm:$0xf]
        %v305 = vld [vmem:[%s206 + $0xfc] sm:$0xf]
        %v306 = vld [vmem:[#allocation5] sm:$0xf]
        %v307 = vld [vmem:[#allocation5 + $0x4] sm:$0xf]
        %v308 = vld [vmem:[#allocation5 + $0x8] sm:$0xf]
        %v309 = vld [vmem:[#allocation5 + $0xc] sm:$0xf]
        %v310 = vld [vmem:[#allocation5 + $0x10] sm:$0xf]
        %v311 = vld [vmem:[#allocation5 + $0x14] sm:$0xf]
        %v312 = vld [vmem:[#allocation5 + $0x18] sm:$0xf]
        %v313 = vld [vmem:[#allocation5 + $0x1c] sm:$0xf]
        %v314 = vld [vmem:[#allocation5 + $0x20] sm:$0xf]
        %v315 = vld [vmem:[#allocation5 + $0x24] sm:$0xf]
        %v316 = vld [vmem:[#allocation5 + $0x28] sm:$0xf]
        %v317 = vld [vmem:[#allocation5 + $0x2c] sm:$0xf]
        %v318 = vld [vmem:[#allocation5 + $0x30] sm:$0xf]
        %v319 = vld [vmem:[#allocation5 + $0x34] sm:$0xf]
        %v320 = vld [vmem:[#allocation5 + $0x38] sm:$0xf]
        %v321 = vld [vmem:[#allocation5 + $0x3c] sm:$0xf]
        %v322 = vld [vmem:[%s239] sm:$0x1]
        %v324 = vlaneseq
        %v325 = vshrl.u32 %v324, 7
        %v326 = vsub.s32 0, %v325
        %v327 = vrot.slane %v322, %v326
        %v393 = vunpack.c.l.b16 %v242
        %v394 = vunpack.c.l.b16 %v243
        %v395 = vunpack.c.l.b16 %v244
        %v396 = vunpack.c.l.b16 %v245
        %v397 = vunpack.c.l.b16 %v246
        %v398 = vunpack.c.l.b16 %v247
        %v399 = vunpack.c.l.b16 %v248
        %v400 = vunpack.c.l.b16 %v249
        %v401 = vunpack.c.l.b16 %v250
        %v402 = vunpack.c.l.b16 %v251
        %v403 = vunpack.c.l.b16 %v252
        %v404 = vunpack.c.l.b16 %v253
        %v405 = vunpack.c.l.b16 %v254
        %v406 = vunpack.c.l.b16 %v255
        %v407 = vunpack.c.l.b16 %v256
        %v408 = vunpack.c.l.b16 %v257
        %v409 = vunpack.c.l.b16 %v258
        %v410 = vunpack.c.l.b16 %v259
        %v411 = vunpack.c.l.b16 %v260
        %v412 = vunpack.c.l.b16 %v261
        %v413 = vunpack.c.l.b16 %v262
        %v414 = vunpack.c.l.b16 %v263
        %v415 = vunpack.c.l.b16 %v264
        %v416 = vunpack.c.l.b16 %v265
        %v417 = vunpack.c.l.b16 %v266
        %v418 = vunpack.c.l.b16 %v267
        %v419 = vunpack.c.l.b16 %v268
        %v420 = vunpack.c.l.b16 %v269
        %v421 = vunpack.c.l.b16 %v270
        %v422 = vunpack.c.l.b16 %v271
        %v423 = vunpack.c.l.b16 %v272
        %v424 = vunpack.c.l.b16 %v273
        %v425 = vunpack.c.l.b16 %v274
        %v426 = vunpack.c.l.b16 %v275
        %v427 = vunpack.c.l.b16 %v276
        %v428 = vunpack.c.l.b16 %v277
        %v429 = vunpack.c.l.b16 %v278
        %v430 = vunpack.c.l.b16 %v279
        %v431 = vunpack.c.l.b16 %v280
        %v432 = vunpack.c.l.b16 %v281
        %v433 = vunpack.c.l.b16 %v282
        %v434 = vunpack.c.l.b16 %v283
        %v435 = vunpack.c.l.b16 %v284
        %v436 = vunpack.c.l.b16 %v285
        %v437 = vunpack.c.l.b16 %v286
        %v438 = vunpack.c.l.b16 %v287
        %v439 = vunpack.c.l.b16 %v288
        %v440 = vunpack.c.l.b16 %v289
        %v441 = vunpack.c.l.b16 %v290
        %v442 = vunpack.c.l.b16 %v291
        %v443 = vunpack.c.l.b16 %v292
        %v444 = vunpack.c.l.b16 %v293
        %v445 = vunpack.c.l.b16 %v294
        %v446 = vunpack.c.l.b16 %v295
        %v447 = vunpack.c.l.b16 %v296
        %v448 = vunpack.c.l.b16 %v297
        %v449 = vunpack.c.l.b16 %v298
        %v450 = vunpack.c.l.b16 %v299
        %v451 = vunpack.c.l.b16 %v300
        %v452 = vunpack.c.l.b16 %v301
        %v453 = vunpack.c.l.b16 %v302
        %v454 = vunpack.c.l.b16 %v303
        %v455 = vunpack.c.l.b16 %v304
        %v456 = vunpack.c.l.b16 %v305
        %v457 = vpack.c.b16 %v394, %v393
        %v458 = vpack.c.b16 %v396, %v395
        %v459 = vpack.c.b16 %v398, %v397
        %v460 = vpack.c.b16 %v400, %v399
        %v461 = vpack.c.b16 %v402, %v401
        %v462 = vpack.c.b16 %v404, %v403
        %v463 = vpack.c.b16 %v406, %v405
        %v464 = vpack.c.b16 %v408, %v407
        %v465 = vpack.c.b16 %v410, %v409
        %v466 = vpack.c.b16 %v412, %v411
        %v467 = vpack.c.b16 %v414, %v413
        %v468 = vpack.c.b16 %v416, %v415
        %v469 = vpack.c.b16 %v418, %v417
        %v470 = vpack.c.b16 %v420, %v419
        %v471 = vpack.c.b16 %v422, %v421
        %v472 = vpack.c.b16 %v424, %v423
        %v473 = vpack.c.b16 %v426, %v425
        %v474 = vpack.c.b16 %v428, %v427
        %v475 = vpack.c.b16 %v430, %v429
        %v476 = vpack.c.b16 %v432, %v431
        %v477 = vpack.c.b16 %v434, %v433
        %v478 = vpack.c.b16 %v436, %v435
        %v479 = vpack.c.b16 %v438, %v437
        %v480 = vpack.c.b16 %v440, %v439
        %v481 = vpack.c.b16 %v442, %v441
        %v482 = vpack.c.b16 %v444, %v443
        %v483 = vpack.c.b16 %v446, %v445
        %v484 = vpack.c.b16 %v448, %v447
        %v485 = vpack.c.b16 %v450, %v449
        %v486 = vpack.c.b16 %v452, %v451
        %v487 = vpack.c.b16 %v454, %v453
        %v488 = vpack.c.b16 %v456, %v455
        %v537 = vunpack.c.l.b16 %v306
        %v538 = vunpack.c.l.b16 %v307
        %v539 = vunpack.c.l.b16 %v308
        %v540 = vunpack.c.l.b16 %v309
        %v541 = vunpack.c.l.b16 %v310
        %v542 = vunpack.c.l.b16 %v311
        %v543 = vunpack.c.l.b16 %v312
        %v544 = vunpack.c.l.b16 %v313
        %v545 = vunpack.c.l.b16 %v314
        %v546 = vunpack.c.l.b16 %v315
        %v547 = vunpack.c.l.b16 %v316
        %v548 = vunpack.c.l.b16 %v317
        %v549 = vunpack.c.l.b16 %v318
        %v550 = vunpack.c.l.b16 %v319
        %v551 = vunpack.c.l.b16 %v320
        %v552 = vunpack.c.l.b16 %v321
        %v553 = vpack.c.b16 %v538, %v537
        %v554 = vpack.c.b16 %v540, %v539
        %v555 = vpack.c.b16 %v542, %v541
        %v556 = vpack.c.b16 %v544, %v543
        %v557 = vpack.c.b16 %v546, %v545
        %v558 = vpack.c.b16 %v548, %v547
        %v559 = vpack.c.b16 %v550, %v549
        %v560 = vpack.c.b16 %v552, %v551
        %569 = vmatprep.subr.bf16.mxu0 0
        %570 = vmatpush1.bf16.msra.mxu0 %v560
        %571 = vmatprep.subr.bf16.mxu0 0
        %572 = vmatpush1.bf16.msra.mxu0 %v559
        %573 = vmatprep.subr.bf16.mxu0 0
        %574 = vmatpush1.bf16.msra.mxu0 %v558
        %575 = vmatprep.subr.bf16.mxu0 0
        %576 = vmatpush1.bf16.msra.mxu0 %v557
        %577 = vmatprep.subr.bf16.mxu0 0
        %578 = vmatpush1.bf16.msra.mxu0 %v556
        %579 = vmatprep.subr.bf16.mxu0 0
        %580 = vmatpush1.bf16.msra.mxu0 %v555
        %581 = vmatprep.subr.bf16.mxu0 0
        %582 = vmatpush1.bf16.msra.mxu0 %v554
        %583 = vmatprep.subr.bf16.mxu0 0
        %584 = vmatpush1.bf16.msra.mxu0 %v553
        %585 = vmatprep.subr.bf16.mxu0 0
        %586 = vmatpush2.bf16.msra.mxu0 0
        %587 = vmatprep.subr.bf16.mxu0 0
        %588 = vmatpush2.bf16.msra.mxu0 0
        %589 = vmatprep.subr.bf16.mxu0 0
        %590 = vmatpush2.bf16.msra.mxu0 0
        %591 = vmatprep.subr.bf16.mxu0 0
        %592 = vmatpush2.bf16.msra.mxu0 0
        %593 = vmatprep.subr.bf16.mxu0 0
        %594 = vmatpush2.bf16.msra.mxu0 0
        %595 = vmatprep.subr.bf16.mxu0 0
        %596 = vmatpush2.bf16.msra.mxu0 0
        %597 = vmatprep.subr.bf16.mxu0 0
        %598 = vmatpush2.bf16.msra.mxu0 0
        %599 = vmatprep.subr.bf16.mxu0 0
        %600 = vmatpush2.bf16.msra.mxu0 0
        %601 = vmatprep.mubr.bf16.mxu0 0
        %602 = vmatmul.mubr.bf16.gmra.mxu0 %v457
        %v603 = vpop.f32.mrf.mxu0
        %v604 = vadd.f32 %v327, %v603
        %v605 = vpop.f32.mrf.mxu0
        %v606 = vpop.f32.mrf.mxu0
        %v607 = vadd.f32 %v327, %v606
        %v608 = vpop.f32.mrf.mxu0
        %609 = vmatprep.mubr.bf16.mxu0 0
        %610 = vmatmul.mubr.bf16.gmra.mxu0 %v458
        %v611 = vpop.f32.mrf.mxu0
        %v612 = vadd.f32 %v327, %v611
        %v613 = vpop.f32.mrf.mxu0
        %v614 = vpop.f32.mrf.mxu0
        %v615 = vadd.f32 %v327, %v614
        %v616 = vpop.f32.mrf.mxu0
        %617 = vmatprep.mubr.bf16.mxu0 0
        %618 = vmatmul.mubr.bf16.gmra.mxu0 %v459
        %v619 = vpop.f32.mrf.mxu0
        %v620 = vadd.f32 %v327, %v619
        %v621 = vpop.f32.mrf.mxu0
        %v622 = vpop.f32.mrf.mxu0
        %v623 = vadd.f32 %v327, %v622
        %v624 = vpop.f32.mrf.mxu0
        %625 = vmatprep.mubr.bf16.mxu0 0
        %626 = vmatmul.mubr.bf16.gmra.mxu0 %v460
        %v627 = vpop.f32.mrf.mxu0
        %v628 = vadd.f32 %v327, %v627
        %v629 = vpop.f32.mrf.mxu0
        %v630 = vpop.f32.mrf.mxu0
        %v631 = vadd.f32 %v327, %v630
        %v632 = vpop.f32.mrf.mxu0
        %633 = vmatprep.mubr.bf16.mxu0 0
        %634 = vmatmul.mubr.bf16.gmra.mxu0 %v461
        %v635 = vpop.f32.mrf.mxu0
        %v636 = vadd.f32 %v327, %v635
        %v637 = vpop.f32.mrf.mxu0
        %v638 = vpop.f32.mrf.mxu0
        %v639 = vadd.f32 %v327, %v638
        %v640 = vpop.f32.mrf.mxu0
        %641 = vmatprep.mubr.bf16.mxu0 0
        %642 = vmatmul.mubr.bf16.gmra.mxu0 %v462
        %v643 = vpop.f32.mrf.mxu0
        %v644 = vadd.f32 %v327, %v643
        %v645 = vpop.f32.mrf.mxu0
        %v646 = vpop.f32.mrf.mxu0
        %v647 = vadd.f32 %v327, %v646
        %v648 = vpop.f32.mrf.mxu0
        %649 = vmatprep.mubr.bf16.mxu0 0
        %650 = vmatmul.mubr.bf16.gmra.mxu0 %v463
        %v651 = vpop.f32.mrf.mxu0
        %v652 = vadd.f32 %v327, %v651
        %v653 = vpop.f32.mrf.mxu0
        %v654 = vpop.f32.mrf.mxu0
        %v655 = vadd.f32 %v327, %v654
        %v656 = vpop.f32.mrf.mxu0
        %657 = vmatprep.mubr.bf16.mxu0 0
        %658 = vmatmul.mubr.bf16.gmra.mxu0 %v464
        %v659 = vpop.f32.mrf.mxu0
        %v660 = vadd.f32 %v327, %v659
        %v661 = vpop.f32.mrf.mxu0
        %v662 = vpop.f32.mrf.mxu0
        %v663 = vadd.f32 %v327, %v662
        %v664 = vpop.f32.mrf.mxu0
        %665 = vmatprep.mubr.bf16.mxu0 0
        %666 = vmatmul.mubr.bf16.gmra.mxu0 %v465
        %v667 = vpop.f32.mrf.mxu0
        %v668 = vadd.f32 %v327, %v667
        %v669 = vpop.f32.mrf.mxu0
        %v670 = vpop.f32.mrf.mxu0
        %v671 = vadd.f32 %v327, %v670
        %v672 = vpop.f32.mrf.mxu0
        %673 = vmatprep.mubr.bf16.mxu0 0
        %674 = vmatmul.mubr.bf16.gmra.mxu0 %v466
        %v675 = vpop.f32.mrf.mxu0
        %v676 = vadd.f32 %v327, %v675
        %v677 = vpop.f32.mrf.mxu0
        %v678 = vpop.f32.mrf.mxu0
        %v679 = vadd.f32 %v327, %v678
        %v680 = vpop.f32.mrf.mxu0
        %681 = vmatprep.mubr.bf16.mxu0 0
        %682 = vmatmul.mubr.bf16.gmra.mxu0 %v467
        %v683 = vpop.f32.mrf.mxu0
        %v684 = vadd.f32 %v327, %v683
        %v685 = vpop.f32.mrf.mxu0
        %v686 = vpop.f32.mrf.mxu0
        %v687 = vadd.f32 %v327, %v686
        %v688 = vpop.f32.mrf.mxu0
        %689 = vmatprep.mubr.bf16.mxu0 0
        %690 = vmatmul.mubr.bf16.gmra.mxu0 %v468
        %v691 = vpop.f32.mrf.mxu0
        %v692 = vadd.f32 %v327, %v691
        %v693 = vpop.f32.mrf.mxu0
        %v694 = vpop.f32.mrf.mxu0
        %v695 = vadd.f32 %v327, %v694
        %v696 = vpop.f32.mrf.mxu0
        %697 = vmatprep.mubr.bf16.mxu0 0
        %698 = vmatmul.mubr.bf16.gmra.mxu0 %v469
        %v699 = vpop.f32.mrf.mxu0
        %v700 = vadd.f32 %v327, %v699
        %v701 = vpop.f32.mrf.mxu0
        %v702 = vpop.f32.mrf.mxu0
        %v703 = vadd.f32 %v327, %v702
        %v704 = vpop.f32.mrf.mxu0
        %705 = vmatprep.mubr.bf16.mxu0 0
        %706 = vmatmul.mubr.bf16.gmra.mxu0 %v470
        %v707 = vpop.f32.mrf.mxu0
        %v708 = vadd.f32 %v327, %v707
        %v709 = vpop.f32.mrf.mxu0
        %v710 = vpop.f32.mrf.mxu0
        %v711 = vadd.f32 %v327, %v710
        %v712 = vpop.f32.mrf.mxu0
        %713 = vmatprep.mubr.bf16.mxu0 0
        %714 = vmatmul.mubr.bf16.gmra.mxu0 %v471
        %v715 = vpop.f32.mrf.mxu0
        %v716 = vadd.f32 %v327, %v715
        %v717 = vpop.f32.mrf.mxu0
        %v718 = vpop.f32.mrf.mxu0
        %v719 = vadd.f32 %v327, %v718
        %v720 = vpop.f32.mrf.mxu0
        %721 = vmatprep.mubr.bf16.mxu0 0
        %722 = vmatmul.mubr.bf16.gmra.mxu0 %v472
        %v723 = vpop.f32.mrf.mxu0
        %v724 = vadd.f32 %v327, %v723
        %v725 = vpop.f32.mrf.mxu0
        %v726 = vpop.f32.mrf.mxu0
        %v727 = vadd.f32 %v327, %v726
        %v728 = vpop.f32.mrf.mxu0
        %729 = vmatprep.mubr.bf16.mxu0 0
        %730 = vmatmul.mubr.bf16.gmra.mxu0 %v473
        %v731 = vpop.f32.mrf.mxu0
        %v732 = vadd.f32 %v327, %v731
        %v733 = vpop.f32.mrf.mxu0
        %v734 = vpop.f32.mrf.mxu0
        %v735 = vadd.f32 %v327, %v734
        %v736 = vpop.f32.mrf.mxu0
        %737 = vmatprep.mubr.bf16.mxu0 0
        %738 = vmatmul.mubr.bf16.gmra.mxu0 %v474
        %v739 = vpop.f32.mrf.mxu0
        %v740 = vadd.f32 %v327, %v739
        %v741 = vpop.f32.mrf.mxu0
        %v742 = vpop.f32.mrf.mxu0
        %v743 = vadd.f32 %v327, %v742
        %v744 = vpop.f32.mrf.mxu0
        %745 = vmatprep.mubr.bf16.mxu0 0
        %746 = vmatmul.mubr.bf16.gmra.mxu0 %v475
        %v747 = vpop.f32.mrf.mxu0
        %v748 = vadd.f32 %v327, %v747
        %v749 = vpop.f32.mrf.mxu0
        %v750 = vpop.f32.mrf.mxu0
        %v751 = vadd.f32 %v327, %v750
        %v752 = vpop.f32.mrf.mxu0
        %753 = vmatprep.mubr.bf16.mxu0 0
        %754 = vmatmul.mubr.bf16.gmra.mxu0 %v476
        %v755 = vpop.f32.mrf.mxu0
        %v756 = vadd.f32 %v327, %v755
        %v757 = vpop.f32.mrf.mxu0
        %v758 = vpop.f32.mrf.mxu0
        %v759 = vadd.f32 %v327, %v758
        %v760 = vpop.f32.mrf.mxu0
        %761 = vmatprep.mubr.bf16.mxu0 0
        %762 = vmatmul.mubr.bf16.gmra.mxu0 %v477
        %v763 = vpop.f32.mrf.mxu0
        %v764 = vadd.f32 %v327, %v763
        %v765 = vpop.f32.mrf.mxu0
        %v766 = vpop.f32.mrf.mxu0
        %v767 = vadd.f32 %v327, %v766
        %v768 = vpop.f32.mrf.mxu0
        %769 = vmatprep.mubr.bf16.mxu0 0
        %770 = vmatmul.mubr.bf16.gmra.mxu0 %v478
        %v771 = vpop.f32.mrf.mxu0
        %v772 = vadd.f32 %v327, %v771
        %v773 = vpop.f32.mrf.mxu0
        %v774 = vpop.f32.mrf.mxu0
        %v775 = vadd.f32 %v327, %v774
        %v776 = vpop.f32.mrf.mxu0
        %777 = vmatprep.mubr.bf16.mxu0 0
        %778 = vmatmul.mubr.bf16.gmra.mxu0 %v479
        %v779 = vpop.f32.mrf.mxu0
        %v780 = vadd.f32 %v327, %v779
        %v781 = vpop.f32.mrf.mxu0
        %v782 = vpop.f32.mrf.mxu0
        %v783 = vadd.f32 %v327, %v782
        %v784 = vpop.f32.mrf.mxu0
        %785 = vmatprep.mubr.bf16.mxu0 0
        %786 = vmatmul.mubr.bf16.gmra.mxu0 %v480
        %v787 = vpop.f32.mrf.mxu0
        %v788 = vadd.f32 %v327, %v787
        %v789 = vpop.f32.mrf.mxu0
        %v790 = vpop.f32.mrf.mxu0
        %v791 = vadd.f32 %v327, %v790
        %v792 = vpop.f32.mrf.mxu0
        %793 = vmatprep.mubr.bf16.mxu0 0
        %794 = vmatmul.mubr.bf16.gmra.mxu0 %v481
        %v795 = vpop.f32.mrf.mxu0
        %v796 = vadd.f32 %v327, %v795
        %v797 = vpop.f32.mrf.mxu0
        %v798 = vpop.f32.mrf.mxu0
        %v799 = vadd.f32 %v327, %v798
        %v800 = vpop.f32.mrf.mxu0
        %801 = vmatprep.mubr.bf16.mxu0 0
        %802 = vmatmul.mubr.bf16.gmra.mxu0 %v482
        %v803 = vpop.f32.mrf.mxu0
        %v804 = vadd.f32 %v327, %v803
        %v805 = vpop.f32.mrf.mxu0
        %v806 = vpop.f32.mrf.mxu0
        %v807 = vadd.f32 %v327, %v806
        %v808 = vpop.f32.mrf.mxu0
        %809 = vmatprep.mubr.bf16.mxu0 0
        %810 = vmatmul.mubr.bf16.gmra.mxu0 %v483
        %v811 = vpop.f32.mrf.mxu0
        %v812 = vadd.f32 %v327, %v811
        %v813 = vpop.f32.mrf.mxu0
        %v814 = vpop.f32.mrf.mxu0
        %v815 = vadd.f32 %v327, %v814
        %v816 = vpop.f32.mrf.mxu0
        %817 = vmatprep.mubr.bf16.mxu0 0
        %818 = vmatmul.mubr.bf16.gmra.mxu0 %v484
        %v819 = vpop.f32.mrf.mxu0
        %v820 = vadd.f32 %v327, %v819
        %v821 = vpop.f32.mrf.mxu0
        %v822 = vpop.f32.mrf.mxu0
        %v823 = vadd.f32 %v327, %v822
        %v824 = vpop.f32.mrf.mxu0
        %825 = vmatprep.mubr.bf16.mxu0 0
        %826 = vmatmul.mubr.bf16.gmra.mxu0 %v485
        %v827 = vpop.f32.mrf.mxu0
        %v828 = vadd.f32 %v327, %v827
        %v829 = vpop.f32.mrf.mxu0
        %v830 = vpop.f32.mrf.mxu0
        %v831 = vadd.f32 %v327, %v830
        %v832 = vpop.f32.mrf.mxu0
        %833 = vmatprep.mubr.bf16.mxu0 0
        %834 = vmatmul.mubr.bf16.gmra.mxu0 %v486
        %v835 = vpop.f32.mrf.mxu0
        %v836 = vadd.f32 %v327, %v835
        %v837 = vpop.f32.mrf.mxu0
        %v838 = vpop.f32.mrf.mxu0
        %v839 = vadd.f32 %v327, %v838
        %v840 = vpop.f32.mrf.mxu0
        %841 = vmatprep.mubr.bf16.mxu0 0
        %842 = vmatmul.mubr.bf16.gmra.mxu0 %v487
        %v843 = vpop.f32.mrf.mxu0
        %v844 = vadd.f32 %v327, %v843
        %v845 = vpop.f32.mrf.mxu0
        %v846 = vpop.f32.mrf.mxu0
        %v847 = vadd.f32 %v327, %v846
        %v848 = vpop.f32.mrf.mxu0
        %849 = vmatprep.mubr.bf16.mxu0 0
        %850 = vmatmul.mubr.bf16.gmra.mxu0 %v488
        %v851 = vpop.f32.mrf.mxu0
        %v852 = vadd.f32 %v327, %v851
        %v853 = vpop.f32.mrf.mxu0
        %v854 = vpop.f32.mrf.mxu0
        %v855 = vadd.f32 %v327, %v854
        %v856 = vpop.f32.mrf.mxu0
        %857 = vdwg.mxu0
        %v858 = vmax.f32 %v604, 0.0
        %v859 = vmax.f32 %v607, 0.0
        %v860 = vmax.f32 %v612, 0.0
        %v861 = vmax.f32 %v615, 0.0
        %v862 = vmax.f32 %v620, 0.0
        %v863 = vmax.f32 %v623, 0.0
        %v864 = vmax.f32 %v628, 0.0
        %v865 = vmax.f32 %v631, 0.0
        %v866 = vmax.f32 %v636, 0.0
        %v867 = vmax.f32 %v639, 0.0
        %v868 = vmax.f32 %v644, 0.0
        %v869 = vmax.f32 %v647, 0.0
        %v870 = vmax.f32 %v652, 0.0
        %v871 = vmax.f32 %v655, 0.0
        %v872 = vmax.f32 %v660, 0.0
        %v873 = vmax.f32 %v663, 0.0
        %v874 = vmax.f32 %v668, 0.0
        %v875 = vmax.f32 %v671, 0.0
        %v876 = vmax.f32 %v676, 0.0
        %v877 = vmax.f32 %v679, 0.0
        %v878 = vmax.f32 %v684, 0.0
        %v879 = vmax.f32 %v687, 0.0
        %v880 = vmax.f32 %v692, 0.0
        %v881 = vmax.f32 %v695, 0.0
        %v882 = vmax.f32 %v700, 0.0
        %v883 = vmax.f32 %v703, 0.0
        %v884 = vmax.f32 %v708, 0.0
        %v885 = vmax.f32 %v711, 0.0
        %v886 = vmax.f32 %v716, 0.0
        %v887 = vmax.f32 %v719, 0.0
        %v888 = vmax.f32 %v724, 0.0
        %v889 = vmax.f32 %v727, 0.0
        %v890 = vmax.f32 %v732, 0.0
        %v891 = vmax.f32 %v735, 0.0
        %v892 = vmax.f32 %v740, 0.0
        %v893 = vmax.f32 %v743, 0.0
        %v894 = vmax.f32 %v748, 0.0
        %v895 = vmax.f32 %v751, 0.0
        %v896 = vmax.f32 %v756, 0.0
        %v897 = vmax.f32 %v759, 0.0
        %v898 = vmax.f32 %v764, 0.0
        %v899 = vmax.f32 %v767, 0.0
        %v900 = vmax.f32 %v772, 0.0
        %v901 = vmax.f32 %v775, 0.0
        %v902 = vmax.f32 %v780, 0.0
        %v903 = vmax.f32 %v783, 0.0
        %v904 = vmax.f32 %v788, 0.0
        %v905 = vmax.f32 %v791, 0.0
        %v906 = vmax.f32 %v796, 0.0
        %v907 = vmax.f32 %v799, 0.0
        %v908 = vmax.f32 %v804, 0.0
        %v909 = vmax.f32 %v807, 0.0
        %v910 = vmax.f32 %v812, 0.0
        %v911 = vmax.f32 %v815, 0.0
        %v912 = vmax.f32 %v820, 0.0
        %v913 = vmax.f32 %v823, 0.0
        %v914 = vmax.f32 %v828, 0.0
        %v915 = vmax.f32 %v831, 0.0
        %v916 = vmax.f32 %v836, 0.0
        %v917 = vmax.f32 %v839, 0.0
        %v918 = vmax.f32 %v844, 0.0
        %v919 = vmax.f32 %v847, 0.0
        %v920 = vmax.f32 %v852, 0.0
        %v921 = vmax.f32 %v855, 0.0
        %v922 = vpack.c.bf16 %v859, %v858
        %v923 = vpack.c.bf16 %v861, %v860
        %v924 = vpack.c.bf16 %v863, %v862
        %v925 = vpack.c.bf16 %v865, %v864
        %v926 = vpack.c.bf16 %v867, %v866
        %v927 = vpack.c.bf16 %v869, %v868
        %v928 = vpack.c.bf16 %v871, %v870
        %v929 = vpack.c.bf16 %v873, %v872
        %v930 = vpack.c.bf16 %v875, %v874
        %v931 = vpack.c.bf16 %v877, %v876
        %v932 = vpack.c.bf16 %v879, %v878
        %v933 = vpack.c.bf16 %v881, %v880
        %v934 = vpack.c.bf16 %v883, %v882
        %v935 = vpack.c.bf16 %v885, %v884
        %v936 = vpack.c.bf16 %v887, %v886
        %v937 = vpack.c.bf16 %v889, %v888
        %v938 = vpack.c.bf16 %v891, %v890
        %v939 = vpack.c.bf16 %v893, %v892
        %v940 = vpack.c.bf16 %v895, %v894
        %v941 = vpack.c.bf16 %v897, %v896
        %v942 = vpack.c.bf16 %v899, %v898
        %v943 = vpack.c.bf16 %v901, %v900
        %v944 = vpack.c.bf16 %v903, %v902
        %v945 = vpack.c.bf16 %v905, %v904
        %v946 = vpack.c.bf16 %v907, %v906
        %v947 = vpack.c.bf16 %v909, %v908
        %v948 = vpack.c.bf16 %v911, %v910
        %v949 = vpack.c.bf16 %v913, %v912
        %v950 = vpack.c.bf16 %v915, %v914
        %v951 = vpack.c.bf16 %v917, %v916
        %v952 = vpack.c.bf16 %v919, %v918
        %v953 = vpack.c.bf16 %v921, %v920
        %v986 = vunpack.c.l.b16 %v922
        %v987 = vunpack.c.h.b16 %v922
        %v988 = vunpack.c.l.b16 %v923
        %v989 = vunpack.c.h.b16 %v923
        %v990 = vunpack.c.l.b16 %v924
        %v991 = vunpack.c.h.b16 %v924
        %v992 = vunpack.c.l.b16 %v925
        %v993 = vunpack.c.h.b16 %v925
        %v994 = vunpack.c.l.b16 %v926
        %v995 = vunpack.c.h.b16 %v926
        %v996 = vunpack.c.l.b16 %v927
        %v997 = vunpack.c.h.b16 %v927
        %v998 = vunpack.c.l.b16 %v928
        %v999 = vunpack.c.h.b16 %v928
        %v1000 = vunpack.c.l.b16 %v929
        %v1001 = vunpack.c.h.b16 %v929
        %v1002 = vunpack.c.l.b16 %v930
        %v1003 = vunpack.c.h.b16 %v930
        %v1004 = vunpack.c.l.b16 %v931
        %v1005 = vunpack.c.h.b16 %v931
        %v1006 = vunpack.c.l.b16 %v932
        %v1007 = vunpack.c.h.b16 %v932
        %v1008 = vunpack.c.l.b16 %v933
        %v1009 = vunpack.c.h.b16 %v933
        %v1010 = vunpack.c.l.b16 %v934
        %v1011 = vunpack.c.h.b16 %v934
        %v1012 = vunpack.c.l.b16 %v935
        %v1013 = vunpack.c.h.b16 %v935
        %v1014 = vunpack.c.l.b16 %v936
        %v1015 = vunpack.c.h.b16 %v936
        %v1016 = vunpack.c.l.b16 %v937
        %v1017 = vunpack.c.h.b16 %v937
        %v1018 = vunpack.c.l.b16 %v938
        %v1019 = vunpack.c.h.b16 %v938
        %v1020 = vunpack.c.l.b16 %v939
        %v1021 = vunpack.c.h.b16 %v939
        %v1022 = vunpack.c.l.b16 %v940
        %v1023 = vunpack.c.h.b16 %v940
        %v1024 = vunpack.c.l.b16 %v941
        %v1025 = vunpack.c.h.b16 %v941
        %v1026 = vunpack.c.l.b16 %v942
        %v1027 = vunpack.c.h.b16 %v942
        %v1028 = vunpack.c.l.b16 %v943
        %v1029 = vunpack.c.h.b16 %v943
        %v1030 = vunpack.c.l.b16 %v944
        %v1031 = vunpack.c.h.b16 %v944
        %v1032 = vunpack.c.l.b16 %v945
        %v1033 = vunpack.c.h.b16 %v945
        %v1034 = vunpack.c.l.b16 %v946
        %v1035 = vunpack.c.h.b16 %v946
        %v1036 = vunpack.c.l.b16 %v947
        %v1037 = vunpack.c.h.b16 %v947
        %v1038 = vunpack.c.l.b16 %v948
        %v1039 = vunpack.c.h.b16 %v948
        %v1040 = vunpack.c.l.b16 %v949
        %v1041 = vunpack.c.h.b16 %v949
        %v1042 = vunpack.c.l.b16 %v950
        %v1043 = vunpack.c.h.b16 %v950
        %v1044 = vunpack.c.l.b16 %v951
        %v1045 = vunpack.c.h.b16 %v951
        %v1046 = vunpack.c.l.b16 %v952
        %v1047 = vunpack.c.h.b16 %v952
        %v1048 = vunpack.c.l.b16 %v953
        %v1049 = vunpack.c.h.b16 %v953
        %v1050 = vpack.c.b16 %v986, %v986
        %v1051 = vpack.c.b16 %v987, %v987
        %v1052 = vpack.c.b16 %v988, %v988
        %v1053 = vpack.c.b16 %v989, %v989
        %v1054 = vpack.c.b16 %v990, %v990
        %v1055 = vpack.c.b16 %v991, %v991
        %v1056 = vpack.c.b16 %v992, %v992
        %v1057 = vpack.c.b16 %v993, %v993
        %v1058 = vpack.c.b16 %v994, %v994
        %v1059 = vpack.c.b16 %v995, %v995
        %v1060 = vpack.c.b16 %v996, %v996
        %v1061 = vpack.c.b16 %v997, %v997
        %v1062 = vpack.c.b16 %v998, %v998
        %v1063 = vpack.c.b16 %v999, %v999
        %v1064 = vpack.c.b16 %v1000, %v1000
        %v1065 = vpack.c.b16 %v1001, %v1001
        %v1066 = vpack.c.b16 %v1002, %v1002
        %v1067 = vpack.c.b16 %v1003, %v1003
        %v1068 = vpack.c.b16 %v1004, %v1004
        %v1069 = vpack.c.b16 %v1005, %v1005
        %v1070 = vpack.c.b16 %v1006, %v1006
        %v1071 = vpack.c.b16 %v1007, %v1007
        %v1072 = vpack.c.b16 %v1008, %v1008
        %v1073 = vpack.c.b16 %v1009, %v1009
        %v1074 = vpack.c.b16 %v1010, %v1010
        %v1075 = vpack.c.b16 %v1011, %v1011
        %v1076 = vpack.c.b16 %v1012, %v1012
        %v1077 = vpack.c.b16 %v1013, %v1013
        %v1078 = vpack.c.b16 %v1014, %v1014
        %v1079 = vpack.c.b16 %v1015, %v1015
        %v1080 = vpack.c.b16 %v1016, %v1016
        %v1081 = vpack.c.b16 %v1017, %v1017
        %v1082 = vpack.c.b16 %v1018, %v1018
        %v1083 = vpack.c.b16 %v1019, %v1019
        %v1084 = vpack.c.b16 %v1020, %v1020
        %v1085 = vpack.c.b16 %v1021, %v1021
        %v1086 = vpack.c.b16 %v1022, %v1022
        %v1087 = vpack.c.b16 %v1023, %v1023
        %v1088 = vpack.c.b16 %v1024, %v1024
        %v1089 = vpack.c.b16 %v1025, %v1025
        %v1090 = vpack.c.b16 %v1026, %v1026
        %v1091 = vpack.c.b16 %v1027, %v1027
        %v1092 = vpack.c.b16 %v1028, %v1028
        %v1093 = vpack.c.b16 %v1029, %v1029
        %v1094 = vpack.c.b16 %v1030, %v1030
        %v1095 = vpack.c.b16 %v1031, %v1031
        %v1096 = vpack.c.b16 %v1032, %v1032
        %v1097 = vpack.c.b16 %v1033, %v1033
        %v1098 = vpack.c.b16 %v1034, %v1034
        %v1099 = vpack.c.b16 %v1035, %v1035
        %v1100 = vpack.c.b16 %v1036, %v1036
        %v1101 = vpack.c.b16 %v1037, %v1037
        %v1102 = vpack.c.b16 %v1038, %v1038
        %v1103 = vpack.c.b16 %v1039, %v1039
        %v1104 = vpack.c.b16 %v1040, %v1040
        %v1105 = vpack.c.b16 %v1041, %v1041
        %v1106 = vpack.c.b16 %v1042, %v1042
        %v1107 = vpack.c.b16 %v1043, %v1043
        %v1108 = vpack.c.b16 %v1044, %v1044
        %v1109 = vpack.c.b16 %v1045, %v1045
        %v1110 = vpack.c.b16 %v1046, %v1046
        %v1111 = vpack.c.b16 %v1047, %v1047
        %v1112 = vpack.c.b16 %v1048, %v1048
        %v1113 = vpack.c.b16 %v1049, %v1049
        %1178 = vst [vmem:[%s235] sm:$0xf] %v1050
        %1179 = vst [vmem:[%s235 + $0x4] sm:$0xf] %v1051
        %1180 = vst [vmem:[%s235 + $0x8] sm:$0xf] %v1052
        %1181 = vst [vmem:[%s235 + $0xc] sm:$0xf] %v1053
        %1182 = vst [vmem:[%s235 + $0x10] sm:$0xf] %v1054
        %1183 = vst [vmem:[%s235 + $0x14] sm:$0xf] %v1055
        %1184 = vst [vmem:[%s235 + $0x18] sm:$0xf] %v1056
        %1185 = vst [vmem:[%s235 + $0x1c] sm:$0xf] %v1057
        %1186 = vst [vmem:[%s235 + $0x20] sm:$0xf] %v1058
        %1187 = vst [vmem:[%s235 + $0x24] sm:$0xf] %v1059
        %1188 = vst [vmem:[%s235 + $0x28] sm:$0xf] %v1060
        %1189 = vst [vmem:[%s235 + $0x2c] sm:$0xf] %v1061
        %1190 = vst [vmem:[%s235 + $0x30] sm:$0xf] %v1062
        %1191 = vst [vmem:[%s235 + $0x34] sm:$0xf] %v1063
        %1192 = vst [vmem:[%s235 + $0x38] sm:$0xf] %v1064
        %1193 = vst [vmem:[%s235 + $0x3c] sm:$0xf] %v1065
        %1194 = vst [vmem:[%s235 + $0x40] sm:$0xf] %v1066
        %1195 = vst [vmem:[%s235 + $0x44] sm:$0xf] %v1067
        %1196 = vst [vmem:[%s235 + $0x48] sm:$0xf] %v1068
        %1197 = vst [vmem:[%s235 + $0x4c] sm:$0xf] %v1069
        %1198 = vst [vmem:[%s235 + $0x50] sm:$0xf] %v1070
        %1199 = vst [vmem:[%s235 + $0x54] sm:$0xf] %v1071
        %1200 = vst [vmem:[%s235 + $0x58] sm:$0xf] %v1072
        %1201 = vst [vmem:[%s235 + $0x5c] sm:$0xf] %v1073
        %1202 = vst [vmem:[%s235 + $0x60] sm:$0xf] %v1074
        %1203 = vst [vmem:[%s235 + $0x64] sm:$0xf] %v1075
        %1204 = vst [vmem:[%s235 + $0x68] sm:$0xf] %v1076
        %1205 = vst [vmem:[%s235 + $0x6c] sm:$0xf] %v1077
        %1206 = vst [vmem:[%s235 + $0x70] sm:$0xf] %v1078
        %1207 = vst [vmem:[%s235 + $0x74] sm:$0xf] %v1079
        %1208 = vst [vmem:[%s235 + $0x78] sm:$0xf] %v1080
        %1209 = vst [vmem:[%s235 + $0x7c] sm:$0xf] %v1081
        %1210 = vst [vmem:[%s235 + $0x80] sm:$0xf] %v1082
        %1211 = vst [vmem:[%s235 + $0x84] sm:$0xf] %v1083
        %1212 = vst [vmem:[%s235 + $0x88] sm:$0xf] %v1084
        %1213 = vst [vmem:[%s235 + $0x8c] sm:$0xf] %v1085
        %1214 = vst [vmem:[%s235 + $0x90] sm:$0xf] %v1086
        %1215 = vst [vmem:[%s235 + $0x94] sm:$0xf] %v1087
        %1216 = vst [vmem:[%s235 + $0x98] sm:$0xf] %v1088
        %1217 = vst [vmem:[%s235 + $0x9c] sm:$0xf] %v1089
        %1218 = vst [vmem:[%s235 + $0xa0] sm:$0xf] %v1090
        %1219 = vst [vmem:[%s235 + $0xa4] sm:$0xf] %v1091
        %1220 = vst [vmem:[%s235 + $0xa8] sm:$0xf] %v1092
        %1221 = vst [vmem:[%s235 + $0xac] sm:$0xf] %v1093
        %1222 = vst [vmem:[%s235 + $0xb0] sm:$0xf] %v1094
        %1223 = vst [vmem:[%s235 + $0xb4] sm:$0xf] %v1095
        %1224 = vst [vmem:[%s235 + $0xb8] sm:$0xf] %v1096
        %1225 = vst [vmem:[%s235 + $0xbc] sm:$0xf] %v1097
        %1226 = vst [vmem:[%s235 + $0xc0] sm:$0xf] %v1098
        %1227 = vst [vmem:[%s235 + $0xc4] sm:$0xf] %v1099
        %1228 = vst [vmem:[%s235 + $0xc8] sm:$0xf] %v1100
        %1229 = vst [vmem:[%s235 + $0xcc] sm:$0xf] %v1101
        %1230 = vst [vmem:[%s235 + $0xd0] sm:$0xf] %v1102
        %1231 = vst [vmem:[%s235 + $0xd4] sm:$0xf] %v1103
        %1232 = vst [vmem:[%s235 + $0xd8] sm:$0xf] %v1104
        %1233 = vst [vmem:[%s235 + $0xdc] sm:$0xf] %v1105
        %1234 = vst [vmem:[%s235 + $0xe0] sm:$0xf] %v1106
        %1235 = vst [vmem:[%s235 + $0xe4] sm:$0xf] %v1107
        %1236 = vst [vmem:[%s235 + $0xe8] sm:$0xf] %v1108
        %1237 = vst [vmem:[%s235 + $0xec] sm:$0xf] %v1109
        %1238 = vst [vmem:[%s235 + $0xf0] sm:$0xf] %v1110
        %1239 = vst [vmem:[%s235 + $0xf4] sm:$0xf] %v1111
        %1240 = vst [vmem:[%s235 + $0xf8] sm:$0xf] %v1112
        %1241 = vst [vmem:[%s235 + $0xfc] sm:$0xf] %v1113
        %s1242 = sand.u32 %s121, 1
        %s1243 = scalar_lea.sflag [#allocation4], %s1242
        %s1244 = sand.u32 %s121, 1
        %s1245 = smul.addr %s1244, 256
        %s1246 = scalar_lea.vmem [#allocation7], %s1245
        // Predicated region
        $region41: #{tpu_custom_call.1} parent=31 // pred_check
          %p1247 = pneg %p131
        $region42: #{tpu_custom_call.1} parent=31 // pred_check_branch
          %1249 = sbr.rel (%p1247) target = $region44
        $region43: #{tpu_custom_call.1} parent=31 // pred_region
          %s1250 = smul.u32 64, %s25
          %s1252 = ssub.s32 4096, 4096
          %1253 = vsyncadd %s1243, %s1252
          %s1254 = sadd.s32 %s26, %s1250
          %s1255 = smul.addr %s1254, 64
          %s1256 = scalar_lea.hbm %s3, %s1255
          %s1257 = sshll.u32 %s1246, 4
          %s1258 = int_to_ptr.vmem [resolvable:$true] %s1257
          %1263 = dma.vmem_to_hbm [thread:$0]  %s1258, 4096, %s1256, %s1243, 64, 64, 4
        $region44: #{tpu_custom_call.1} parent=31 // pred_fallthru
          _
      $region32: #{tpu_custom_call.1} parent=5 // pred_fallthru
        _
      %p1264 = scmp.le.s32.totalorder 2, %s16
      // Predicated region
      $region45: #{tpu_custom_call.1} parent=5 // pred_check
        %p1265 = pneg %p1264
      $region46: #{tpu_custom_call.1} parent=5 // pred_check_branch
        %1267 = sbr.rel (%p1265) target = $region48
      $region47: #{tpu_custom_call.1} parent=5 // pred_region
        %s1268 = ssub.s32 %s16, 2
        // Predicated region
        $region49: #{tpu_custom_call.1} parent=47 // pred_check
          %p1269 = pneg %p137
        $region50: #{tpu_custom_call.1} parent=47 // pred_check_branch
          %1271 = sbr.rel (%p1269) target = $region52
        $region51: #{tpu_custom_call.1} parent=47 // pred_region
          %s1272 = sand.u32 %s122, 1
          %s1273 = scalar_lea.sflag [#allocation4], %s1272
          %s1274 = sand.u32 %s122, 1
          %s1275 = smul.addr %s1274, 256
          %s1276 = scalar_lea.vmem [#allocation7], %s1275
          %1277 = dma.done %s1273, 4096
        $region52: #{tpu_custom_call.1} parent=47 // pred_fallthru
          _
      $region48: #{tpu_custom_call.1} parent=5 // pred_fallthru
        _
    $region6: #{tpu_custom_call.1} parent=1 // loop_footer
      %s20 = sadd.s32 1, %s16
    $region7: #{tpu_custom_call.1} parent=1 // loop_footer_branch
      %15 = sbr.rel target = $region3
    $region8: #{tpu_custom_call.1} parent=1 // loop_exit
      _
    %1278 = vsyncpa [#allocation3], 1
    %s1279 = scalar_lea.sflag [#allocation3], 1
    %1280 = vsyncpa %s1279, 1
    %1281 = vsyncpa [#allocation6], 1
    %1282 = vsyncpa [#allocation4], 1
    %s1283 = scalar_lea.sflag [#allocation4], 1
    %1284 = vsyncpa %s1283, 1

</llo_original>
